<compile_context>
chip_gen: v7x
topology: tpu7x:2x2x1
jax: 0.10.0
libtpu: 0.0.40
codegen_flags: <defaults>
</compile_context>

<pallas_src>
import functools

import jax
import jax.numpy as jnp
from jax.experimental import pallas as pl
from jax.experimental.pallas import tpu as pltpu


_LANES = 128
_SUBLANES = 8


def _padded_f32_bytes(rows, cols):
    """VMEM footprint of an f32 (rows, cols) block after (8, 128) tiling."""
    return (pl.cdiv(rows, _SUBLANES) * _SUBLANES) * (pl.cdiv(cols, _LANES) * _LANES) * 4


def _vmem_capacity_bytes():
    try:
        return int(pltpu.get_tpu_info().vmem_capacity_bytes)
    except Exception:
        return 64 * 1024 * 1024  # conservative default (v7x per-TensorCore VMEM)


def _plan_tiles(n, n_cls, max_tile_n):
    """Pick (tile_n, num_tiles, num_chunks, inner) from a VMEM-derived budget."""
    cap = _vmem_capacity_bytes()
    # Double-buffered, (8,128)-padded VMEM bytes per sample:
    #   y_preds (1, T) + y_trues (1, T)  -> 2 * 32 B
    #   domain_trues (T, 1)              -> 512 B
    #   domain_preds (T, C)              -> ceil(C/128)*128*4 B
    per_sample = 2 * (2 * 32 + 512 + pl.cdiv(n_cls, _LANES) * _LANES * 4)
    budget = int(0.35 * cap)
    tile = max(budget // per_sample, _LANES)
    tile = min(tile, int(max_tile_n))
    tile = max((tile // _LANES) * _LANES, _LANES)
    if n <= tile:
        return n, 1, 1, 1                       # single full-extent tile
    num_tiles = pl.cdiv(n, tile)
    if num_tiles > 1 and num_tiles % 2 == 1:
        # Try a slightly smaller tile giving an even tile count so the "parallel"
        # chunk axis splits evenly across v7x's two TensorCores (no clamped tile).
        alt = pl.cdiv(pl.cdiv(n, num_tiles + 1), _LANES) * _LANES
        if alt >= _LANES and pl.cdiv(n, alt) % 2 == 0:
            tile = alt
            num_tiles = pl.cdiv(n, alt)
    num_chunks = 2 if num_tiles % 2 == 0 else 1
    inner = num_tiles // num_chunks
    return tile, num_tiles, num_chunks, inner


def _daloss_kernel(num_tiles, inner, rem, yp_ref, yt_ref, dt_ref, dp_ref,
                   mse_ref, nll_ref):
    i = pl.program_id(0)            # chunk ("parallel"): megacore / v7x 2-TC split
    j = pl.program_id(1)            # tile within chunk ("arbitrary"): reduction axis
    t = i * inner + j               # global tile index
    tile_n, n_cls = dp_ref.shape

    # Per-chunk resident accumulator blocks: init once at the first tile.
    @pl.when(j == 0)
    def _init():
        mse_ref[...] = jnp.zeros_like(mse_ref)
        nll_ref[...] = jnp.zeros_like(nll_ref)

    def _accumulate(n_valid):
        # n_valid is a *static* int (== tile_n everywhere except the last partial tile).
        yp = yp_ref[...]                        # (1, tile_n) f32, lane-dense
        yt = yt_ref[...]                        # (1, tile_n) f32, lane-dense
        dt = dt_ref[...]                        # (tile_n, 1) i32 targets, row-major
        dp = dp_ref[...]                        # (tile_n, C) f32 log-probs, natural layout

        diff = yp - yt
        sq = diff * diff                                                    # (1, tile_n)
        cls = jax.lax.broadcasted_iota(jnp.int32, (tile_n, n_cls), 1)
        pick = cls == dt                                                    # one-hot mask

        if n_valid != tile_n:
            # Masked path: only ever executed for the single partial tile.
            lane = jax.lax.broadcasted_iota(jnp.int32, (1, tile_n), 1)
            sq = jnp.where(lane < n_valid, sq, 0.0)                 # NaN-safe select
            row = jax.lax.broadcasted_iota(jnp.int32, (tile_n, n_cls), 0)
            pick = jnp.logical_and(pick, row < n_valid)

        # Reduce the whole tile to two scalars; broadcast-add into the (1, 128) block.
        mse_ref[...] += jnp.sum(sq)
        nll_ref[...] += jnp.sum(jnp.where(pick, dp, 0.0))

    if rem == tile_n:
        _accumulate(tile_n)                     # no partial tile: single unmasked hot path
    else:
        @pl.when(t != num_tiles - 1)
        def _full_tile():
            _accumulate(tile_n)

        @pl.when(t == num_tiles - 1)
        def _partial_tile():
            _accumulate(rem)


def _daloss_impl(y_preds, domain_preds, y, lambda_, *, max_tile_n=131072):
    n = y_preds.shape[0]
    n_cls = domain_preds.shape[1]

    tile_n, num_tiles, num_chunks, inner = _plan_tiles(n, n_cls, max_tile_n)
    rem = n - (num_tiles - 1) * tile_n          # rows in the last (possibly partial) tile

    # Lane-dense streams for the MSE; targets row-major so the NLL gather works on
    # domain_preds in its natural (N, C) layout (no transpose / no extra HBM pass on it).
    yp = y_preds.astype(jnp.float32).reshape(1, n)
    yt = y[:, 0].astype(jnp.float32).reshape(1, n)
    # NOTE: float->int truncation matches .long() for exactly-representable labels.
    dt = y[:, 1].astype(jnp.int32).reshape(n, 1)
    dp = domain_preds.astype(jnp.float32)       # (N, C), consumed as-is

    def col_map(i, j):
        return (0, i * inner + j)

    def row_map(i, j):
        return (i * inner + j, 0)

    out_w = num_chunks * _LANES
    footprint = (2 * (2 * _padded_f32_bytes(1, tile_n)
                      + _padded_f32_bytes(tile_n, 1)
                      + _padded_f32_bytes(tile_n, n_cls))
                 + 2 * _padded_f32_bytes(1, out_w))
    cap = _vmem_capacity_bytes()
    vmem_limit = int(min(max(footprint + (4 << 20), 16 << 20), cap - (4 << 20)))

    mse_parts, nll_parts = pl.pallas_call(
        functools.partial(_daloss_kernel, num_tiles, inner, rem),
        out_shape=(jax.ShapeDtypeStruct((1, out_w), jnp.float32),
                   jax.ShapeDtypeStruct((1, out_w), jnp.float32)),
        grid_spec=pltpu.PrefetchScalarGridSpec(
            num_scalar_prefetch=0,
            grid=(num_chunks, inner),
            in_specs=[
                pl.BlockSpec((1, tile_n), col_map),         # y_preds (lane-dense)
                pl.BlockSpec((1, tile_n), col_map),         # y_trues (lane-dense)
                pl.BlockSpec((tile_n, 1), row_map),         # domain_trues (row-major)
                pl.BlockSpec((tile_n, n_cls), row_map),     # domain_preds (natural layout)
            ],
            out_specs=[
                pl.BlockSpec((1, _LANES), lambda i, j: (0, i)),   # per-chunk mse sum
                pl.BlockSpec((1, _LANES), lambda i, j: (0, i)),   # per-chunk nll sum
            ],
        ),
        compiler_params=pltpu.CompilerParams(
            dimension_semantics=("parallel", "arbitrary"),
            vmem_limit_bytes=vmem_limit,
        ),
    )(yp, yt, dt, dp)

    # <= 2 per-chunk scalars remain; the rest of the math is fused into this jit.
    mse_sum = jnp.sum(mse_parts.reshape(num_chunks, _LANES)[:, 0])
    nll_sum = jnp.sum(nll_parts.reshape(num_chunks, _LANES)[:, 0])
    inv_n = jnp.float32(1.0 / n)
    mse = mse_sum * inv_n
    nll = -(nll_sum * inv_n)
    lam = jnp.asarray(lambda_, jnp.float32)
    total = mse + lam * nll
    return total, mse, nll


_daloss_jit = jax.jit(_daloss_impl, static_argnames=("max_tile_n",))


def daloss(y_preds, domain_preds, y, lambda_, *, weight=None, max_tile_n=131072):
    """DALoss forward: returns (mse + lambda_ * nll, mse, nll)."""
    if weight is not None:
        raise NotImplementedError("class-weighted NLL (weight != None) is not supported")
    assert y.ndim == 2 and y.shape[1] == 2, "y must have shape (N, 2)"
    assert y_preds.shape[0] == y.shape[0] == domain_preds.shape[0]
    return _daloss_jit(y_preds, domain_preds, y, lambda_, max_tile_n=max_tile_n)


if __name__ == "__main__":
    def reference(y_preds, domain_preds, y, lam):
        mse = jnp.mean((y_preds - y[:, 0]) ** 2)
        idx = y[:, 1].astype(jnp.int32)
        nll = -jnp.mean(domain_preds[jnp.arange(y.shape[0]), idx])
        return mse + lam * nll, mse, nll

    def make_inputs(key, n, c):
        k1, k2, k3, k4 = jax.random.split(key, 4)
        y_preds = jax.random.normal(k1, (n,), dtype=jnp.float32)
        domain_preds = jax.nn.log_softmax(
            jax.random.normal(k2, (n, c), dtype=jnp.float32), axis=-1)
        y_trues = jax.random.normal(k3, (n,), dtype=jnp.float32)
        domain_trues = jax.random.randint(k4, (n,), 0, c).astype(jnp.float32)
        return y_preds, domain_preds, jnp.stack([y_trues, domain_trues], axis=1)

    k0, k1, k2 = jax.random.split(jax.random.PRNGKey(0), 3)

    # Small case matching typical module usage: batch=8, 4 domains, single tile.
    yp, dp, y = make_inputs(k0, 8, 4)
    out = daloss(yp, dp, y, 0.5)
    jax.block_until_ready(out)
    ref = reference(yp, dp, y, 0.5)
    for a, b in zip(out, ref):
        assert jnp.allclose(a, b, atol=1e-5, rtol=1e-5), (a, b)

    # Multi-tile path with a partial last tile (600 rows forced into 128-row tiles,
    # odd tile count -> single chunk, masked path exercised).
    yp, dp, y = make_inputs(k1, 600, 4)
    out = daloss(yp, dp, y, 0.25, max_tile_n=128)
    jax.block_until_ready(out)
    ref = reference(yp, dp, y, 0.25)
    for a, b in zip(out, ref):
        assert jnp.allclose(a, b, atol=1e-4, rtol=1e-4), (a, b)

    # Even tile count -> two "parallel" chunks (v7x 2-TC split), 5 domains.
    yp, dp, y = make_inputs(k2, 1024, 5)
    out = daloss(yp, dp, y, 2.0, max_tile_n=256)
    jax.block_until_ready(out)
    ref = reference(yp, dp, y, 2.0)
    for a, b in zip(out, ref):
        assert jnp.allclose(a, b, atol=1e-4, rtol=1e-4), (a, b)

    print("KERNEL_OK")
</pallas_src>

<mosaic_0001>
module attributes {stable_mosaic.version = 11 : i64} {
  func.func @_daloss_kernel(%arg0: i32, %arg1: i32, %arg2: memref<1x8xf32, #tpu.memory_space<vmem>>, %arg3: memref<1x8xf32, #tpu.memory_space<vmem>>, %arg4: memref<8x1xi32, #tpu.memory_space<vmem>>, %arg5: memref<8x4xf32, #tpu.memory_space<vmem>>, %arg6: memref<1x128xf32, #tpu.memory_space<vmem>>, %arg7: memref<1x128xf32, #tpu.memory_space<vmem>>) attributes {dimension_semantics = [#tpu.dimension_semantics<parallel>, #tpu.dimension_semantics<arbitrary>], iteration_bounds = array<i64: 1, 1>, scalar_prefetch = 0 : i64, scratch_operands = 0 : i64, tpu.core_type = #tpu.core_type<tc>, window_params = [{transform_indices = @transform_0, window_bounds = array<i64: 1, 8>}, {transform_indices = @transform_1, window_bounds = array<i64: 1, 8>}, {transform_indices = @transform_2, window_bounds = array<i64: 8, 1>}, {transform_indices = @transform_3, window_bounds = array<i64: 8, 4>}, {transform_indices = @transform_4, window_bounds = array<i64: 1, 128>}, {transform_indices = @transform_5, window_bounds = array<i64: 1, 128>}]} {
    %c0_i32 = arith.constant 0 : i32
    %0 = arith.cmpi eq, %arg1, %c0_i32 : i32
    %1 = arith.extui %0 : i1 to i32
    %c0_i32_0 = arith.constant 0 : i32
    %2 = arith.cmpi ne, %1, %c0_i32_0 : i32
    scf.if %2 {
      %cst_18 = arith.constant 0.000000e+00 : f32
      %30 = vector.broadcast %cst_18 : f32 to vector<1x128xf32>
      %c0_19 = arith.constant 0 : index
      %c0_20 = arith.constant 0 : index
      %31 = vector.load %arg6[%c0_19, %c0_20] : memref<1x128xf32, #tpu.memory_space<vmem>>, vector<1x128xf32>
      tpu.vector_store %arg6[%c0_19, %c0_20], %30 {strides = array<i32>} : memref<1x128xf32, #tpu.memory_space<vmem>>, vector<1x128xf32>,
      %cst_21 = arith.constant 0.000000e+00 : f32
      %32 = vector.broadcast %cst_21 : f32 to vector<1x128xf32>
      %c0_22 = arith.constant 0 : index
      %c0_23 = arith.constant 0 : index
      %33 = vector.load %arg7[%c0_22, %c0_23] : memref<1x128xf32, #tpu.memory_space<vmem>>, vector<1x128xf32>
      tpu.vector_store %arg7[%c0_22, %c0_23], %32 {strides = array<i32>} : memref<1x128xf32, #tpu.memory_space<vmem>>, vector<1x128xf32>,
    } else {
    }
    %c0 = arith.constant 0 : index
    %c0_1 = arith.constant 0 : index
    %3 = vector.load %arg2[%c0, %c0_1] : memref<1x8xf32, #tpu.memory_space<vmem>>, vector<1x8xf32>
    %c0_2 = arith.constant 0 : index
    %c0_3 = arith.constant 0 : index
    %4 = vector.load %arg3[%c0_2, %c0_3] : memref<1x8xf32, #tpu.memory_space<vmem>>, vector<1x8xf32>
    %c0_4 = arith.constant 0 : index
    %c0_5 = arith.constant 0 : index
    %5 = vector.load %arg4[%c0_4, %c0_5] : memref<8x1xi32, #tpu.memory_space<vmem>>, vector<8x1xi32>
    %c0_6 = arith.constant 0 : index
    %c0_7 = arith.constant 0 : index
    %6 = vector.load %arg5[%c0_6, %c0_7] : memref<8x4xf32, #tpu.memory_space<vmem>>, vector<8x4xf32>
    %7 = arith.subf %3, %4 : vector<1x8xf32>
    %8 = arith.mulf %7, %7 : vector<1x8xf32>
    %9 = tpu.iota {dimensions = array<i32: 1>} : vector<8x4xi32>
    %10 = vector.broadcast %5 : vector<8x1xi32> to vector<8x4xi32>
    %11 = arith.cmpi eq, %9, %10 : vector<8x4xi32>
    %c0_8 = arith.constant 0 : index
    %c0_9 = arith.constant 0 : index
    %12 = vector.load %arg6[%c0_8, %c0_9] : memref<1x128xf32, #tpu.memory_space<vmem>>, vector<1x128xf32>
    %13 = vector.shape_cast %8 : vector<1x8xf32> to vector<1x1x8xf32>
    %cst = arith.constant dense<0.000000e+00> : vector<1xf32>
    %14 = vector.multi_reduction <add>, %13, %cst [1, 2] : vector<1x1x8xf32> to vector<1xf32>
    %15 = vector.shape_cast %14 : vector<1xf32> to vector<1x1x1xf32>
    %16 = vector.extract %15[0, 0, 0] : f32 from vector<1x1x1xf32>
    %17 = vector.broadcast %16 : f32 to vector<1x128xf32>
    %18 = arith.addf %12, %17 : vector<1x128xf32>
    %c0_10 = arith.constant 0 : index
    %c0_11 = arith.constant 0 : index
    %19 = vector.load %arg6[%c0_10, %c0_11] : memref<1x128xf32, #tpu.memory_space<vmem>>, vector<1x128xf32>
    tpu.vector_store %arg6[%c0_10, %c0_11], %18 {strides = array<i32>} : memref<1x128xf32, #tpu.memory_space<vmem>>, vector<1x128xf32>,
    %c0_12 = arith.constant 0 : index
    %c0_13 = arith.constant 0 : index
    %20 = vector.load %arg7[%c0_12, %c0_13] : memref<1x128xf32, #tpu.memory_space<vmem>>, vector<1x128xf32>
    %cst_14 = arith.constant 0.000000e+00 : f32
    %21 = vector.broadcast %cst_14 : f32 to vector<8x4xf32>
    %22 = arith.select %11, %6, %21 : vector<8x4xi1>, vector<8x4xf32>
    %23 = vector.shape_cast %22 : vector<8x4xf32> to vector<1x8x4xf32>
    %cst_15 = arith.constant dense<0.000000e+00> : vector<1xf32>
    %24 = vector.multi_reduction <add>, %23, %cst_15 [1, 2] : vector<1x8x4xf32> to vector<1xf32>
    %25 = vector.shape_cast %24 : vector<1xf32> to vector<1x1x1xf32>
    %26 = vector.extract %25[0, 0, 0] : f32 from vector<1x1x1xf32>
    %27 = vector.broadcast %26 : f32 to vector<1x128xf32>
    %28 = arith.addf %20, %27 : vector<1x128xf32>
    %c0_16 = arith.constant 0 : index
    %c0_17 = arith.constant 0 : index
    %29 = vector.load %arg7[%c0_16, %c0_17] : memref<1x128xf32, #tpu.memory_space<vmem>>, vector<1x128xf32>
    tpu.vector_store %arg7[%c0_16, %c0_17], %28 {strides = array<i32>} : memref<1x128xf32, #tpu.memory_space<vmem>>, vector<1x128xf32>,
    return
  }
  func.func @transform_0(%arg0: i32, %arg1: i32) -> (i32, i32) {
    %c1_i32 = arith.constant 1 : i32
    %0 = arith.muli %arg0, %c1_i32 : i32
    %1 = arith.addi %0, %arg1 : i32
    %c0_i32 = arith.constant 0 : i32
    %c0_i32_0 = arith.constant 0 : i32
    return %c0_i32, %1 : i32, i32
  }
  func.func @transform_1(%arg0: i32, %arg1: i32) -> (i32, i32) {
    %c1_i32 = arith.constant 1 : i32
    %0 = arith.muli %arg0, %c1_i32 : i32
    %1 = arith.addi %0, %arg1 : i32
    %c0_i32 = arith.constant 0 : i32
    %c0_i32_0 = arith.constant 0 : i32
    return %c0_i32, %1 : i32, i32
  }
  func.func @transform_2(%arg0: i32, %arg1: i32) -> (i32, i32) {
    %c1_i32 = arith.constant 1 : i32
    %0 = arith.muli %arg0, %c1_i32 : i32
    %1 = arith.addi %0, %arg1 : i32
    %c0_i32 = arith.constant 0 : i32
    %c0_i32_0 = arith.constant 0 : i32
    return %1, %c0_i32 : i32, i32
  }
  func.func @transform_3(%arg0: i32, %arg1: i32) -> (i32, i32) {
    %c1_i32 = arith.constant 1 : i32
    %0 = arith.muli %arg0, %c1_i32 : i32
    %1 = arith.addi %0, %arg1 : i32
    %c0_i32 = arith.constant 0 : i32
    %c0_i32_0 = arith.constant 0 : i32
    return %1, %c0_i32 : i32, i32
  }
  func.func @transform_4(%arg0: i32, %arg1: i32) -> (i32, i32) {
    %c0_i32 = arith.constant 0 : i32
    %c0_i32_0 = arith.constant 0 : i32
    return %c0_i32, %arg0 : i32, i32
  }
  func.func @transform_5(%arg0: i32, %arg1: i32) -> (i32, i32) {
    %c0_i32 = arith.constant 0 : i32
    %c0_i32_0 = arith.constant 0 : i32
    return %c0_i32, %arg0 : i32, i32
  }
}

</mosaic_0001>

<llo_original>
// kernel: _daloss_impl.1
$region0: #{_daloss_impl.1}
  #allocation0 [shape = 'u32[]', space=smem, size = 0x4, offset = 0x4, fixed_abs, tag = 'smem constant byte address 0x4 - core index']
  #allocation1 [shape = 'u32[144,128]{1,0:T(1,128)}', space=vmem, size = 0x12000, scoped, tag = 'internal scratch']
  %s0 = inlined_call_operand.vmem [shape: f32[1,8], index: 0, kind: input, shape index: {}]
  %s1 = inlined_call_operand.vmem [shape: f32[1,8], index: 1, kind: input, shape index: {}]
  %s2 = inlined_call_operand.vmem [shape: s32[8,1], index: 2, kind: input, shape index: {}]
  %s3 = inlined_call_operand.vmem [shape: f32[8,4], index: 3, kind: input, shape index: {}]
  %s4 = inlined_call_operand.vmem [shape: f32[1,128], index: 4, kind: output, shape index: {0}]
  %s5 = inlined_call_operand.vmem [shape: f32[1,128], index: 5, kind: output, shape index: {1}]
  %6 = xla_tuple %s4, %s5
  %s7 = sld [smem:[#allocation0]]
  $region38: #{_daloss_impl.1} parent=0
    _
  %s9 = ssub.s32 1, %s7
  %s10 = scalar_select 0, %s9, %s7
  // Predicated region
  $region2: #{_daloss_impl.1} parent=0 // pred_check
    _
  $region3: #{_daloss_impl.1} parent=0 // pred_check_branch
    %12 = sbr.rel (0) target = $region5
  $region4: #{_daloss_impl.1} parent=0 // pred_region
    %s13 = sadd.s32 0, 0
    %p14 = scmp.lt.s32.totalorder %s13, 0
    %s15 = scalar_select %p14, %s13, 0
    %s16 = scalar_lea.vmem %s0, %s15
    %s17 = sadd.s32 0, 0
  $region5: #{_daloss_impl.1} parent=0 // pred_fallthru
    _
  // Predicated region
  $region6: #{_daloss_impl.1} parent=0 // pred_check
    _
  $region7: #{_daloss_impl.1} parent=0 // pred_check_branch
    %19 = sbr.rel (0) target = $region9
  $region8: #{_daloss_impl.1} parent=0 // pred_region
    %s20 = sadd.s32 0, 0
    %p21 = scmp.lt.s32.totalorder %s20, 0
    %s22 = scalar_select %p21, %s20, 0
    %s23 = scalar_lea.vmem %s1, %s22
    %s24 = sadd.s32 0, 0
  $region9: #{_daloss_impl.1} parent=0 // pred_fallthru
    _
  // Predicated region
  $region10: #{_daloss_impl.1} parent=0 // pred_check
    _
  $region11: #{_daloss_impl.1} parent=0 // pred_check_branch
    %26 = sbr.rel (0) target = $region13
  $region12: #{_daloss_impl.1} parent=0 // pred_region
    %s27 = sadd.s32 0, 0
    %p28 = scmp.lt.s32.totalorder %s27, 0
    %s29 = scalar_select %p28, %s27, 0
    %s30 = smul.addr %s29, 8
    %s31 = scalar_lea.vmem %s2, %s30
    %s32 = sadd.s32 0, 0
  $region13: #{_daloss_impl.1} parent=0 // pred_fallthru
    _
  // Predicated region
  $region14: #{_daloss_impl.1} parent=0 // pred_check
    _
  $region15: #{_daloss_impl.1} parent=0 // pred_check_branch
    %34 = sbr.rel (0) target = $region17
  $region16: #{_daloss_impl.1} parent=0 // pred_region
    %s35 = sadd.s32 0, 0
    %p36 = scmp.lt.s32.totalorder %s35, 0
    %s37 = scalar_select %p36, %s35, 0
    %s38 = smul.addr %s37, 8
    %s39 = scalar_lea.vmem %s3, %s38
    %s40 = sadd.s32 0, 0
  $region17: #{_daloss_impl.1} parent=0 // pred_fallthru
    _
  %s41 = sadd.s32 0, 0
  %p42 = scmp.lt.s32.totalorder %s41, 0
  %s43 = scalar_select %p42, %s41, 0
  %s44 = scalar_lea.vmem %s0, %s43
  %s45 = sadd.s32 0, 0
  %p46 = scmp.lt.s32.totalorder %s45, 0
  %s47 = scalar_select %p46, %s45, 0
  %s48 = scalar_lea.vmem %s1, %s47
  %s49 = sadd.s32 0, 0
  %p50 = scmp.lt.s32.totalorder %s49, 0
  %s51 = scalar_select %p50, %s49, 0
  %s52 = smul.addr %s51, 8
  %s53 = scalar_lea.vmem %s2, %s52
  %s54 = sadd.s32 0, 0
  %p55 = scmp.lt.s32.totalorder %s54, 0
  %s56 = scalar_select %p55, %s54, 0
  %s57 = smul.addr %s56, 8
  %s58 = scalar_lea.vmem %s3, %s57
  %s59 = sadd.s32 0, 0
  %p60 = scmp.lt.s32.totalorder %s59, 0
  %s61 = scalar_select %p60, %s59, 0
  %s62 = scalar_lea.vmem %s0, %s61
  %s63 = sadd.s32 0, 0
  %s64 = sadd.s32 0, 0
  %p65 = scmp.lt.s32.totalorder %s64, 0
  %s66 = scalar_select %p65, %s64, 0
  %s67 = scalar_lea.vmem %s1, %s66
  %s68 = sadd.s32 0, 0
  %s69 = sadd.s32 0, 0
  %p70 = scmp.lt.s32.totalorder %s69, 0
  %s71 = scalar_select %p70, %s69, 0
  %s72 = smul.addr %s71, 8
  %s73 = scalar_lea.vmem %s2, %s72
  %s74 = sadd.s32 0, 0
  %s75 = sadd.s32 0, 0
  %p76 = scmp.lt.s32.totalorder %s75, 0
  %s77 = scalar_select %p76, %s75, 0
  %s78 = smul.addr %s77, 8
  %s79 = scalar_lea.vmem %s3, %s78
  %s80 = sadd.s32 0, 0
  %p81 = scmp.eq.s32.totalorder 0, 0
  // Predicated region
  $region18: #{_daloss_impl.1} parent=0 // pred_check
    %p82 = pneg %p81
  $region19: #{_daloss_impl.1} parent=0 // pred_check_branch
    %84 = sbr.rel (%p82) target = $region21
  $region20: #{_daloss_impl.1} parent=0 // pred_region
    %85 = vst [vmem:[%s4] sm:$0x1] 0.0
    %86 = vst [vmem:[%s5] sm:$0x1] 0.0
  $region21: #{_daloss_impl.1} parent=0 // pred_fallthru
    _
  %v87 = vld [vmem:[%s62] sm:$0x1]
  %v88 = vld [vmem:[%s67] sm:$0x1]
  %v89 = vld [vmem:[%s73] sm:$0xff]
  %v90 = vld [vmem:[%s79] sm:$0xff]
  %v91 = vsub.f32 %v87, %v88
  %v92 = vmul.f32 %v91, %v91
  %v93 = vlaneseq
  %v94 = vand.u32 %v93, 127
  %95 = vset.pattern.permute.xlu0 0
  %96 = vperm.xlu0 %95, %v89
  %v97 = vpop.permute.xlu0 %96
  %vm98 = vcmp.eq.s32.totalorder %v94, %v97
  %v99 = vld [vmem:[%s4] sm:$0x1]
  %vm100 = vcmask 57344
  %v101 = vsel %vm100, %v92, 0.0
  %102 = vadd.xlane.f32.xlu0 %v101
  %v103 = vpop.xlane.xlu0 %102
  %v104 = vrot.slane %v103, 4
  %v105 = vadd.f32 %v103, %v104
  %v106 = vrot.slane %v105, 2
  %v107 = vadd.f32 %v105, %v106
  %v108 = vrot.slane %v107, 1
  %v109 = vadd.f32 %v107, %v108
  %s110 = vtos %v109
  %v111 = vstv %s110
  %v112 = vadd.f32 %v99, %v111
  %113 = vst [vmem:[%s4] sm:$0x1] %v112
  %v114 = vld [vmem:[%s5] sm:$0x1]
  %v115 = vsel %vm98, %v90, 0.0
  %vm116 = vcmask 31744
  %v117 = vsel %vm116, %v115, 0.0
  %118 = vadd.xlane.f32.xlu0 %v117
  %v119 = vpop.xlane.xlu0 %118
  %v120 = vrot.slane %v119, 4
  %v121 = vadd.f32 %v119, %v120
  %v122 = vrot.slane %v121, 2
  %v123 = vadd.f32 %v121, %v122
  %v124 = vrot.slane %v123, 1
  %v125 = vadd.f32 %v123, %v124
  %s126 = vtos %v125
  %v127 = vstv %s126
  %v128 = vadd.f32 %v114, %v127
  %129 = vst [vmem:[%s5] sm:$0x1] %v128
  // Predicated region
  $region22: #{_daloss_impl.1} parent=0 // pred_check
    _
  $region23: #{_daloss_impl.1} parent=0 // pred_check_branch
    %131 = sbr.rel (0) target = $region25
  $region24: #{_daloss_impl.1} parent=0 // pred_region
    _
  $region25: #{_daloss_impl.1} parent=0 // pred_fallthru
    _
  // Predicated region
  $region26: #{_daloss_impl.1} parent=0 // pred_check
    _
  $region27: #{_daloss_impl.1} parent=0 // pred_check_branch
    %133 = sbr.rel (0) target = $region29
  $region28: #{_daloss_impl.1} parent=0 // pred_region
    _
  $region29: #{_daloss_impl.1} parent=0 // pred_fallthru
    _
  // Predicated region
  $region30: #{_daloss_impl.1} parent=0 // pred_check
    _
  $region31: #{_daloss_impl.1} parent=0 // pred_check_branch
    %135 = sbr.rel (0) target = $region33
  $region32: #{_daloss_impl.1} parent=0 // pred_region
    _
  $region33: #{_daloss_impl.1} parent=0 // pred_fallthru
    _
  // Predicated region
  $region34: #{_daloss_impl.1} parent=0 // pred_check
    _
  $region35: #{_daloss_impl.1} parent=0 // pred_check_branch
    %137 = sbr.rel (0) target = $region37
  $region36: #{_daloss_impl.1} parent=0 // pred_region
    _
  $region37: #{_daloss_impl.1} parent=0 // pred_fallthru
    _

</llo_original>
